<compile_context>
chip_gen: v7x
topology: tpu7x:2x2x1
jax: 0.10.0
libtpu: 0.0.40
codegen_flags: <defaults>
</compile_context>

<pallas_src>
import numpy as np
import jax
import jax.numpy as jnp
from jax import lax
from jax.experimental import pallas as pl
from jax.experimental.pallas import tpu as pltpu

# ------------------------------ example sizes --------------------------------
BATCH  = 2
SEQ    = 8
IN_CH  = 64      # input_channel
OUT_CH = 128     # output_channel (lane-dense: full 128-lane vreg width)


# --------------------------------- kernel ------------------------------------
def _rho_kernel(x_ref, h_ref, o_ref):
    # x_ref: (tile_m, in_ch), h_ref: (out_ch, in_ch), o_ref: (tile_m, out_ch)
    h_abs = jnp.abs(h_ref[...])
    # Contract x's last dim with H's last dim (== F.linear(x, |H|) = x @ |H|.T)
    # without materializing a transpose inside the kernel.
    y = lax.dot_general(
        x_ref[...], h_abs,
        dimension_numbers=(((1,), (1,)), ((), ())),
        preferred_element_type=jnp.float32,
    )
    o_ref[...] = jnp.tanh(y * 1.7)


# --------------------------------- wrapper ------------------------------------
def rho_layer_forward(x, H):
    """Fused Pallas forward of rho_layer.  `b` of the PyTorch module is unused
    in its forward (F.linear is called without bias), so it is not an input here."""
    *lead, in_ch = x.shape
    out_ch = H.shape[0]
    x2d = x.reshape(-1, in_ch)
    M = x2d.shape[0]

    # Row tiling: one step for small inputs; 256-row parallel tiles when M is large
    # (fills the MXU row dimension on v6e/v7x and feeds both v7x TensorCores).
    tile_m = 256 if (M % 256 == 0) else M
    grid = (M // tile_m,)

    out = pl.pallas_call(
        _rho_kernel,
        out_shape=jax.ShapeDtypeStruct((M, out_ch), jnp.float32),
        grid=grid,
        in_specs=[
            pl.BlockSpec((tile_m, in_ch), lambda i: (i, 0)),
            pl.BlockSpec((out_ch, in_ch), lambda i: (0, 0)),   # weights resident
        ],
        out_specs=pl.BlockSpec((tile_m, out_ch), lambda i: (i, 0)),
        compiler_params=pltpu.CompilerParams(
            dimension_semantics=("parallel",)),
    )(x2d, H)
    return out.reshape(*lead, out_ch)


# ------------------------------ pure-JAX reference -----------------------------
def ref_forward(x, H):
    return jnp.tanh(1.7 * jnp.einsum("...i,oi->...o", x, jnp.abs(H)))


# ----------------------------------- main --------------------------------------
if __name__ == "__main__":
    key = jax.random.PRNGKey(0)
    kx, kh, kb = jax.random.split(key, 3)

    x = jax.random.normal(kx, (BATCH, SEQ, IN_CH), jnp.float32)
    # Parameters initialized like the PyTorch module: normal_(0, 0.1)
    H = 0.1 * jax.random.normal(kh, (OUT_CH, IN_CH), jnp.float32)
    b = 0.1 * jax.random.normal(kb, (OUT_CH,), jnp.float32)  # parameter exists but is
    #                                                          unused in forward (matches
    #                                                          F.linear(x, H) w/o bias).

    out = jax.block_until_ready(rho_layer_forward(x, H))
    ref = jax.block_until_ready(ref_forward(x, H))

    assert out.shape == (BATCH, SEQ, OUT_CH), out.shape
    np.testing.assert_allclose(np.asarray(out), np.asarray(ref), rtol=3e-3, atol=3e-3)

    print("KERNEL_OK")
</pallas_src>

<mosaic_0001>
module attributes {stable_mosaic.version = 11 : i64} {
  func.func @_rho_kernel(%arg0: i32, %arg1: memref<16x64xf32, #tpu.memory_space<vmem>>, %arg2: memref<128x64xf32, #tpu.memory_space<vmem>>, %arg3: memref<16x128xf32, #tpu.memory_space<vmem>>) attributes {dimension_semantics = [#tpu.dimension_semantics<parallel>], iteration_bounds = array<i64: 1>, scalar_prefetch = 0 : i64, scratch_operands = 0 : i64, tpu.core_type = #tpu.core_type<tc>, window_params = [{transform_indices = @transform_0, window_bounds = array<i64: 16, 64>}, {pipeline_mode = #tpu.pipeline_mode<synchronous>, transform_indices = @transform_1, window_bounds = array<i64: 128, 64>}, {transform_indices = @transform_2, window_bounds = array<i64: 16, 128>}]} {
    %c0 = arith.constant 0 : index
    %c0_0 = arith.constant 0 : index
    %0 = vector.load %arg2[%c0, %c0_0] : memref<128x64xf32, #tpu.memory_space<vmem>>, vector<128x64xf32>
    %1 = math.absf %0 : vector<128x64xf32>
    %c0_1 = arith.constant 0 : index
    %c0_2 = arith.constant 0 : index
    %2 = vector.load %arg1[%c0_1, %c0_2] : memref<16x64xf32, #tpu.memory_space<vmem>>, vector<16x64xf32>
    %cst = arith.constant dense<0.000000e+00> : vector<16x128xf32>
    %3 = tpu.matmul %2, %1, %cst {dimension_numbers = #tpu.dot_dimension_numbers<[1], [1], [0], [0], [0, 0, 1, 0], [], []>} : vector<16x64xf32>, vector<128x64xf32>, vector<16x128xf32> -> vector<16x128xf32>
    %cst_3 = arith.constant 1.700000e+00 : f32
    %4 = vector.broadcast %cst_3 : f32 to vector<16x128xf32>
    %5 = arith.mulf %3, %4 : vector<16x128xf32>
    %6 = math.tanh %5 : vector<16x128xf32>
    %c0_4 = arith.constant 0 : index
    %c0_5 = arith.constant 0 : index
    %7 = vector.load %arg3[%c0_4, %c0_5] : memref<16x128xf32, #tpu.memory_space<vmem>>, vector<16x128xf32>
    tpu.vector_store %arg3[%c0_4, %c0_5], %6 {strides = array<i32>} : memref<16x128xf32, #tpu.memory_space<vmem>>, vector<16x128xf32>,
    return
  }
  func.func @transform_0(%arg0: i32) -> (i32, i32) {
    %c0_i32 = arith.constant 0 : i32
    %c0_i32_0 = arith.constant 0 : i32
    return %arg0, %c0_i32 : i32, i32
  }
  func.func @transform_1(%arg0: i32) -> (i32, i32) {
    %c0_i32 = arith.constant 0 : i32
    %c0_i32_0 = arith.constant 0 : i32
    %c0_i32_1 = arith.constant 0 : i32
    return %c0_i32, %c0_i32_0 : i32, i32
  }
  func.func @transform_2(%arg0: i32) -> (i32, i32) {
    %c0_i32 = arith.constant 0 : i32
    %c0_i32_0 = arith.constant 0 : i32
    return %arg0, %c0_i32 : i32, i32
  }
}

</mosaic_0001>

<llo_original>
// kernel: tpu_custom_call.1
$region0: #{tpu_custom_call.1}
  #allocation0 [shape = 'u32[]', space=smem, size = 0x4, offset = 0x4, fixed_abs, tag = 'smem constant byte address 0x4 - core index']
  #allocation1 [shape = 'u32[144,128]{1,0:T(1,128)}', space=vmem, size = 0x12000, scoped, tag = 'internal scratch']
  %s0 = inlined_call_operand.vmem [shape: f32[16,64], index: 0, kind: input, shape index: {}]
  %s1 = inlined_call_operand.vmem [shape: f32[128,64], index: 1, kind: input, shape index: {}]
  %s2 = inlined_call_operand.hbm [shape: f32[16,128], index: 2, kind: output, shape index: {}]
  %s3 = sld [smem:[#allocation0]]
  $region18: #{tpu_custom_call.1} parent=0
    _
  %s5 = ssub.s32 1, %s3
  %s6 = scalar_select 0, %s5, %s3
  $region1: #{tpu_custom_call.1} parent=0
    #allocation2 [shape = 'u8[8192]{0}', space=vmem, size = 0x2000, scoped, tag = 'output window, operand 0, single buffered']
    #allocation3 [shape = 's32[1]{0}', space=sflag, size = 0x4, scoped, tag = 'scoped memory for tpu_custom_call.1']
    %7 = vsyncpa [#allocation3], 0
    // Predicated region
    $region2: #{tpu_custom_call.1} parent=1 // pred_check
      _
    $region3: #{tpu_custom_call.1} parent=1 // pred_check_branch
      %9 = sbr.rel (0) target = $region5
    $region4: #{tpu_custom_call.1} parent=1 // pred_region
      _
    $region5: #{tpu_custom_call.1} parent=1 // pred_fallthru
      _
    // Predicated region
    $region6: #{tpu_custom_call.1} parent=1 // pred_check
      _
    $region7: #{tpu_custom_call.1} parent=1 // pred_check_branch
      %11 = sbr.rel (0) target = $region9
    $region8: #{tpu_custom_call.1} parent=1 // pred_region
      _
    $region9: #{tpu_custom_call.1} parent=1 // pred_fallthru
      _
    %v12 = vld [vmem:[%s1] sm:$0xff]
    %v13 = vld [vmem:[%s1 + $0x8] sm:$0xff]
    %v14 = vld [vmem:[%s1 + $0x10] sm:$0xff]
    %v15 = vld [vmem:[%s1 + $0x18] sm:$0xff]
    %v16 = vld [vmem:[%s1 + $0x20] sm:$0xff]
    %v17 = vld [vmem:[%s1 + $0x28] sm:$0xff]
    %v18 = vld [vmem:[%s1 + $0x30] sm:$0xff]
    %v19 = vld [vmem:[%s1 + $0x38] sm:$0xff]
    %v20 = vld [vmem:[%s1 + $0x40] sm:$0xff]
    %v21 = vld [vmem:[%s1 + $0x48] sm:$0xff]
    %v22 = vld [vmem:[%s1 + $0x50] sm:$0xff]
    %v23 = vld [vmem:[%s1 + $0x58] sm:$0xff]
    %v24 = vld [vmem:[%s1 + $0x60] sm:$0xff]
    %v25 = vld [vmem:[%s1 + $0x68] sm:$0xff]
    %v26 = vld [vmem:[%s1 + $0x70] sm:$0xff]
    %v27 = vld [vmem:[%s1 + $0x78] sm:$0xff]
    %v28 = vand.u32 2147483647, %v12
    %v29 = vand.u32 2147483647, %v13
    %v30 = vand.u32 2147483647, %v14
    %v31 = vand.u32 2147483647, %v15
    %v32 = vand.u32 2147483647, %v16
    %v33 = vand.u32 2147483647, %v17
    %v34 = vand.u32 2147483647, %v18
    %v35 = vand.u32 2147483647, %v19
    %v36 = vand.u32 2147483647, %v20
    %v37 = vand.u32 2147483647, %v21
    %v38 = vand.u32 2147483647, %v22
    %v39 = vand.u32 2147483647, %v23
    %v40 = vand.u32 2147483647, %v24
    %v41 = vand.u32 2147483647, %v25
    %v42 = vand.u32 2147483647, %v26
    %v43 = vand.u32 2147483647, %v27
    %v44 = vld [vmem:[%s0] sm:$0xff]
    %v45 = vld [vmem:[%s0 + $0x8] sm:$0xff]
    %vm46 = vcmask 523264
    %v48 = vsel %vm46, %v44, 0
    %v51 = vsel %vm46, %v45, 0
    %v54 = vsel %vm46, %v28, 0
    %v57 = vsel %vm46, %v29, 0
    %v60 = vsel %vm46, %v30, 0
    %v63 = vsel %vm46, %v31, 0
    %v66 = vsel %vm46, %v32, 0
    %v69 = vsel %vm46, %v33, 0
    %v72 = vsel %vm46, %v34, 0
    %v75 = vsel %vm46, %v35, 0
    %v78 = vsel %vm46, %v36, 0
    %v81 = vsel %vm46, %v37, 0
    %v84 = vsel %vm46, %v38, 0
    %v87 = vsel %vm46, %v39, 0
    %v90 = vsel %vm46, %v40, 0
    %v93 = vsel %vm46, %v41, 0
    %v96 = vsel %vm46, %v42, 0
    %v99 = vsel %vm46, %v43, 0
    %101 = vmatprep.subr.mxu0 0.0
    %102 = vmatpush1.xpose.msra.mxu0 %v54
    %103 = vmatprep.subr.mxu0 0.0
    %104 = vmatpush1.xpose.msra.mxu0 %v57
    %105 = vmatprep.subr.mxu0 0.0
    %106 = vmatpush1.xpose.msra.mxu0 %v60
    %107 = vmatprep.subr.mxu0 0.0
    %108 = vmatpush1.xpose.msra.mxu0 %v63
    %109 = vmatprep.subr.mxu0 0.0
    %110 = vmatpush1.xpose.msra.mxu0 %v66
    %111 = vmatprep.subr.mxu0 0.0
    %112 = vmatpush1.xpose.msra.mxu0 %v69
    %113 = vmatprep.subr.mxu0 0.0
    %114 = vmatpush1.xpose.msra.mxu0 %v72
    %115 = vmatprep.subr.mxu0 0.0
    %116 = vmatpush1.xpose.msra.mxu0 %v75
    %117 = vmatprep.subr.mxu0 0.0
    %118 = vmatpush1.xpose.msra.mxu0 %v78
    %119 = vmatprep.subr.mxu0 0.0
    %120 = vmatpush1.xpose.msra.mxu0 %v81
    %121 = vmatprep.subr.mxu0 0.0
    %122 = vmatpush1.xpose.msra.mxu0 %v84
    %123 = vmatprep.subr.mxu0 0.0
    %124 = vmatpush1.xpose.msra.mxu0 %v87
    %125 = vmatprep.subr.mxu0 0.0
    %126 = vmatpush1.xpose.msra.mxu0 %v90
    %127 = vmatprep.subr.mxu0 0.0
    %128 = vmatpush1.xpose.msra.mxu0 %v93
    %129 = vmatprep.subr.mxu0 0.0
    %130 = vmatpush1.xpose.msra.mxu0 %v96
    %131 = vmatprep.subr.mxu0 0.0
    %132 = vmatpush1.xpose.msra.mxu0 %v99
    %133 = vmatprep.subr.mxu0 0.0
    %134 = vmatpush1.xpose.msra.mxu0 0.0
    %135 = vmatprep.subr.mxu0 0.0
    %136 = vmatpush1.xpose.msra.mxu0 0.0
    %137 = vmatprep.subr.mxu0 0.0
    %138 = vmatpush1.xpose.msra.mxu0 0.0
    %139 = vmatprep.subr.mxu0 0.0
    %140 = vmatpush1.xpose.msra.mxu0 0.0
    %141 = vmatprep.subr.mxu0 0.0
    %142 = vmatpush1.xpose.msra.mxu0 0.0
    %143 = vmatprep.subr.mxu0 0.0
    %144 = vmatpush1.xpose.msra.mxu0 0.0
    %145 = vmatprep.subr.mxu0 0.0
    %146 = vmatpush1.xpose.msra.mxu0 0.0
    %147 = vmatprep.subr.mxu0 0.0
    %148 = vmatpush1.xpose.msra.mxu0 0.0
    %149 = vmatprep.subr.mxu0 0.0
    %150 = vmatpush1.xpose.msra.mxu0 0.0
    %151 = vmatprep.subr.mxu0 0.0
    %152 = vmatpush1.xpose.msra.mxu0 0.0
    %153 = vmatprep.subr.mxu0 0.0
    %154 = vmatpush1.xpose.msra.mxu0 0.0
    %155 = vmatprep.subr.mxu0 0.0
    %156 = vmatpush1.xpose.msra.mxu0 0.0
    %157 = vmatprep.subr.mxu0 0.0
    %158 = vmatpush1.xpose.msra.mxu0 0.0
    %159 = vmatprep.subr.mxu0 0.0
    %160 = vmatpush1.xpose.msra.mxu0 0.0
    %161 = vmatprep.subr.mxu0 0.0
    %162 = vmatpush1.xpose.msra.mxu0 0.0
    %163 = vmatprep.subr.mxu0 0.0
    %164 = vmatpush1.xpose.msra.mxu0 0.0
    %165 = vmatprep.mubr.f32.mxu0 0.0
    %166 = vmatmul.mubr.f32.gmra.mrb[0].mxu0 %v48
    %v167 = vpop.f32.mrb[0].mxu0
    %v168 = vadd.f32 0.0, %v167
    %v169 = vpop.f32.mrb[0].mxu0
    %170 = vmatprep.mubr.f32.mxu0 0.0
    %171 = vmatmul.mubr.f32.gmra.mrb[0].mxu0 %v51
    %v172 = vpop.f32.mrb[0].mxu0
    %v173 = vadd.f32 0.0, %v172
    %v174 = vpop.f32.mrb[0].mxu0
    %175 = vdwg.mxu0
    %v176 = vmul.f32 %v168, 1.7
    %v177 = vmul.f32 %v173, 1.7
    %v178 = vtanh.pop %v176
    %v179 = vtanh.pop %v177
    %180 = vst [vmem:[#allocation2] sm:$0xff] %v178
    %181 = vst [vmem:[#allocation2 + $0x8] sm:$0xff] %v179
    // Predicated region
    $region10: #{tpu_custom_call.1} parent=1 // pred_check
      _
    $region11: #{tpu_custom_call.1} parent=1 // pred_check_branch
      %183 = sbr.rel (0) target = $region13
    $region12: #{tpu_custom_call.1} parent=1 // pred_region
      %s185 = ssub.s32 256, 256
      %186 = vsyncadd [#allocation3], %s185
      %s187 = sshll.u32 [#allocation2], 4
      %s188 = int_to_ptr.vmem [resolvable:$true] %s187
      %193 = dma.vmem_to_hbm [thread:$0]  %s188, 256, %s2, [#allocation3], 128, 128, 8
    $region13: #{tpu_custom_call.1} parent=1 // pred_fallthru
      _
    // Predicated region
    $region14: #{tpu_custom_call.1} parent=1 // pred_check
      _
    $region15: #{tpu_custom_call.1} parent=1 // pred_check_branch
      %195 = sbr.rel (0) target = $region17
    $region16: #{tpu_custom_call.1} parent=1 // pred_region
      %196 = dma.done [#allocation3], 256
    $region17: #{tpu_custom_call.1} parent=1 // pred_fallthru
      _
    %197 = vsyncpa [#allocation3], 1

</llo_original>
